<compile_context>
chip_gen: v5e
topology: v5e:2x2
jax: 0.10.0
libtpu: 0.0.40
codegen_flags: <defaults>
</compile_context>

<pallas_src>
import functools

import jax
import jax.numpy as jnp
from jax.experimental import pallas as pl
from jax.experimental.pallas import tpu as pltpu


# --------------------------------------------------------------------------
# kernel
# --------------------------------------------------------------------------
def _basic_block_kernel(x_ref, m_ref, a1_ref, a2_ref, bn_ref, *rest,
                        H, has_proj):
    """One batch-block (B images, M = B*H flattened NHWC rows) per grid step.

      x_ref  : (M, W*Cin)         bf16  flattened NHWC rows
      m_ref  : (M, 2)             f32   row-shift validity masks (dy=0 / dy=2)
      a1_ref : (W*Cin,  3*W*Cmid) bf16  conv1 banded weights, dy taps along N
      a2_ref : (W*Cmid, 3*W*Cmid) bf16  conv2 banded weights
      bn_ref : (4|6, W*Cmid)      f32   folded BN rows [s1,b1,s2,b2,(ss,bs)]
      bsc_ref: (W*Cin, W*Cmid)    bf16  block-diag 1x1 shortcut (proj only)
      o_ref  : (M, W*Cmid)        bf16  lane-dense output rows
    """
    if has_proj:
        bsc_ref, o_ref = rest
    else:
        (o_ref,) = rest

    M, WCo = o_ref.shape
    cdt = x_ref.dtype                       # bf16 (MXU input dtype)

    x = x_ref[...]                          # (M, W*Cin) bf16
    m_up = m_ref[:, 0:1]                    # 0.0 on the first row of each image
    m_dn = m_ref[:, 1:2]                    # 0.0 on the last row of each image
    zrow = jnp.zeros((1, WCo), jnp.float32)

    def conv3x3(inp, band_ref):
        # Single MXU matmul (all three dy taps concatenated along the output
        # dim -> N = 3*W*Cmid), then the dy=0 / dy=2 row shifts are applied on
        # the f32 outputs via a sublane shift + boundary mask.  The dx taps
        # and left/right zero padding are already folded into the band.
        y = jnp.dot(inp, band_ref[...], preferred_element_type=jnp.float32)
        y0 = y[:, 0 * WCo:1 * WCo]
        y1 = y[:, 1 * WCo:2 * WCo]
        y2 = y[:, 2 * WCo:3 * WCo]
        up = jnp.concatenate([zrow, y0[:M - 1, :]], axis=0)   # out[h] += y0[h-1]
        dn = jnp.concatenate([y2[1:, :], zrow], axis=0)       # out[h] += y2[h+1]
        return y1 + m_up * up + m_dn * dn

    s1, b1 = bn_ref[0:1, :], bn_ref[1:2, :]
    s2, b2 = bn_ref[2:3, :], bn_ref[3:4, :]

    h1 = jnp.maximum(conv3x3(x, a1_ref) * s1 + b1, 0.0)        # conv1+BN1+ReLU
    out = conv3x3(h1.astype(cdt), a2_ref) * s2 + b2            # conv2+BN2

    if has_proj:
        sc = jnp.dot(x, bsc_ref[...], preferred_element_type=jnp.float32)
        sc = sc * bn_ref[4:5, :] + bn_ref[5:6, :]              # 1x1 conv + BN
    else:
        sc = x.astype(jnp.float32)                             # identity shortcut

    # lane-dense store: last dim is W*Cmid (>=128), bf16 writeback.
    o_ref[...] = jnp.maximum(out + sc, 0.0).astype(o_ref.dtype)


# --------------------------------------------------------------------------
# wrapper / glue
# --------------------------------------------------------------------------
def fold_bn(gamma, beta, mean, var, eps=1e-5):
    scale = gamma / jnp.sqrt(var + eps)
    return scale, beta - mean * scale


def _band3x3_cat(w_hwio, W):
    """(3,3,Cs,Co) HWIO 3x3 weights -> (W*Cs, 3*W*Co) banded matrix.

    Column block dy applies all three dx taps (with implicit zero padding at
    the left/right image border) of tap row dy to one flattened NHWC row.
    NOTE: band density is 3/W, so keep this formulation only while
    W*C <= ~512; larger layers need W-tiling / channel-tiled conv.
    """
    _, _, Cs, Co = w_hwio.shape
    bands = []
    for dy in range(3):
        b = jnp.zeros((W * Cs, W * Co), jnp.float32)
        for dx in range(3):
            # input column = output column + dx - 1 (out-of-range -> zero pad)
            shift = jnp.eye(W, W, 1 - dx, dtype=jnp.float32)
            b = b + jnp.kron(shift, w_hwio[dy, dx].astype(jnp.float32))
        bands.append(b)
    return jnp.concatenate(bands, axis=1)


def make_plan(params, W, compute_dtype=jnp.bfloat16):
    """Hoisted per-layer preprocessing: banded conv weights + folded BN rows.
    Build once per layer and reuse across forward passes."""
    Cin, Cmid = params["w1"].shape[2], params["w1"].shape[3]
    a1 = _band3x3_cat(params["w1"], W).astype(compute_dtype)   # (W*Cin,  3*W*Cmid)
    a2 = _band3x3_cat(params["w2"], W).astype(compute_dtype)   # (W*Cmid, 3*W*Cmid)
    s1, b1 = fold_bn(*params["bn1"])
    s2, b2 = fold_bn(*params["bn2"])
    rows = [jnp.tile(s1, W), jnp.tile(b1, W), jnp.tile(s2, W), jnp.tile(b2, W)]
    bsc = None
    if params["w_sc"] is not None:
        bsc = jnp.kron(jnp.eye(W), params["w_sc"].astype(jnp.float32)).astype(compute_dtype)
        ss, bs = fold_bn(*params["bn_sc"])
        rows += [jnp.tile(ss, W), jnp.tile(bs, W)]
    bn = jnp.stack(rows).astype(jnp.float32)                   # (4|6, W*Cmid)
    return {"a1": a1, "a2": a2, "bn": bn, "bsc": bsc,
            "W": W, "Cin": Cin, "Cmid": Cmid}


def _pick_batch_block(N, H, target_rows=256, max_rows=1024):
    """Smallest divisor B of N with B*H >= target_rows (MXU row fill),
    else the largest divisor keeping the activation slab modest."""
    best = 1
    for b in range(1, N + 1):
        if N % b or b * H > max_rows:
            continue
        best = b
        if b * H >= target_rows:
            break
    return best


def basic_block_rows(x_rows, plan, H):
    """x_rows: (N*H, W*Cin) flattened NHWC rows. Returns (N*H, W*Cmid) bf16.
    Chain consecutive BasicBlocks in this layout to avoid NCHW<->NHWC
    transposes (full HBM round trips) between blocks."""
    compute_dtype = jnp.bfloat16
    x_rows = x_rows.astype(compute_dtype)
    NH, WCi = x_rows.shape
    N = NH // H
    W, Cin, Cmid = plan["W"], plan["Cin"], plan["Cmid"]
    WCo = W * Cmid
    assert WCi == W * Cin and NH == N * H

    has_proj = plan["bsc"] is not None
    if not has_proj:
        assert Cin == Cmid, "identity shortcut requires in_planes == planes"

    B = _pick_batch_block(N, H)
    M = B * H

    # Row-shift validity masks (first / last row of each image in the block).
    h_idx = jnp.tile(jnp.arange(H, dtype=jnp.int32), B)
    masks = jnp.stack([(h_idx != 0).astype(jnp.float32),
                       (h_idx != H - 1).astype(jnp.float32)], axis=1)  # (M, 2)

    def const(shape):
        # TODO(synk): pipeline_mode=pl.Buffered(1) would halve the VMEM of
        #             these constant-index blocks on v7x; kept default for
        #             maximum compatibility.
        return pl.BlockSpec(shape, lambda n: (0, 0))

    inputs = [x_rows, masks, plan["a1"], plan["a2"], plan["bn"]]
    in_specs = [
        pl.BlockSpec((M, WCi), lambda n: (n, 0)),
        const((M, 2)),
        const((WCi, 3 * WCo)),
        const((WCo, 3 * WCo)),
        const(plan["bn"].shape),
    ]
    if has_proj:
        inputs.append(plan["bsc"])
        in_specs.append(const((WCi, WCo)))

    flops = 2 * NH * (WCi * 3 * WCo + WCo * 3 * WCo
                      + (WCi * WCo if has_proj else 0))
    bytes_accessed = (NH * (WCi + WCo) * 2                       # activations (bf16)
                      + (WCi + WCo) * 3 * WCo * 2                # banded weights
                      + (WCi * WCo * 2 if has_proj else 0)
                      + int(plan["bn"].size) * 4 + M * 2 * 4)    # BN rows + masks

    kernel = functools.partial(_basic_block_kernel, H=H, has_proj=has_proj)

    return pl.pallas_call(
        kernel,
        out_shape=jax.ShapeDtypeStruct((NH, WCo), compute_dtype),
        grid_spec=pltpu.PrefetchScalarGridSpec(
            num_scalar_prefetch=0,
            grid=(N // B,),
            in_specs=in_specs,
            out_specs=pl.BlockSpec((M, WCo), lambda n: (n, 0)),
        ),
        compiler_params=pltpu.CompilerParams(
            dimension_semantics=("parallel",)),
        cost_estimate=pl.CostEstimate(flops=flops, transcendentals=0,
                                      bytes_accessed=bytes_accessed),
    )(*inputs)


def basic_block(x_nchw, params, stride=1):
    """NCHW convenience wrapper (layout conversion only; kernel is NHWC rows)."""
    # TODO(synk): stride > 1 (downsampling) shortcut path not implemented;
    #             the module's default stride=1 path is what this covers.
    assert stride == 1, "only stride=1 supported"
    N, Cin, H, W = x_nchw.shape
    plan = make_plan(params, W)   # NOTE: hoist out of the hot path in real use
    x_rows = jnp.transpose(x_nchw, (0, 2, 3, 1)).reshape(N * H, W * Cin)
    out_rows = basic_block_rows(x_rows, plan, H)
    out = out_rows.reshape(N, H, W, plan["Cmid"])
    return jnp.transpose(out, (0, 3, 1, 2))


# --------------------------------------------------------------------------
# reference (mirrors the kernel's bf16-input / f32-accumulation quantization)
# --------------------------------------------------------------------------
def reference_forward(x_nchw, params):
    x = jnp.transpose(x_nchw, (0, 2, 3, 1))
    xb = x.astype(jnp.bfloat16)
    dn = ("NHWC", "HWIO", "NHWC")
    s1, b1 = fold_bn(*params["bn1"])
    s2, b2 = fold_bn(*params["bn2"])
    y = jax.lax.conv_general_dilated(xb, params["w1"].astype(jnp.bfloat16),
                                     (1, 1), "SAME", dimension_numbers=dn,
                                     preferred_element_type=jnp.float32)
    y = jnp.maximum(y * s1 + b1, 0.0)
    y = jax.lax.conv_general_dilated(y.astype(jnp.bfloat16),
                                     params["w2"].astype(jnp.bfloat16),
                                     (1, 1), "SAME", dimension_numbers=dn,
                                     preferred_element_type=jnp.float32)
    y = y * s2 + b2
    if params["w_sc"] is None:
        sc = xb.astype(jnp.float32)
    else:
        ss, bs = fold_bn(*params["bn_sc"])
        sc = jnp.einsum("nhwc,cd->nhwd", xb,
                        params["w_sc"].astype(jnp.bfloat16),
                        preferred_element_type=jnp.float32)
        sc = sc * ss + bs
    out = jnp.maximum(y + sc, 0.0)
    return jnp.transpose(out, (0, 3, 1, 2))


def make_params(key, in_planes, planes, stride=1):
    ks = jax.random.split(key, 16)

    def bn(k):
        k0, k1, k2, k3 = jax.random.split(k, 4)
        gamma = 1.0 + 0.1 * jax.random.normal(k0, (planes,), jnp.float32)
        beta = 0.1 * jax.random.normal(k1, (planes,), jnp.float32)
        mean = 0.1 * jax.random.normal(k2, (planes,), jnp.float32)
        var = 0.5 + jnp.abs(jax.random.normal(k3, (planes,), jnp.float32))
        return (gamma, beta, mean, var)

    params = {
        # HWIO layout (== transpose(pytorch OIHW weight, (2, 3, 1, 0)))
        "w1": 0.2 * jax.random.normal(ks[0], (3, 3, in_planes, planes), jnp.float32),
        "bn1": bn(ks[1]),
        "w2": 0.2 * jax.random.normal(ks[2], (3, 3, planes, planes), jnp.float32),
        "bn2": bn(ks[3]),
        "w_sc": None,
        "bn_sc": None,
    }
    if stride != 1 or in_planes != planes:
        params["w_sc"] = 0.2 * jax.random.normal(ks[4], (in_planes, planes), jnp.float32)
        params["bn_sc"] = bn(ks[5])
    return params


if __name__ == "__main__":
    key = jax.random.PRNGKey(0)
    k_x1, k_p1, k_x2, k_p2 = jax.random.split(key, 4)

    N, Cin, H, W = 2, 4, 16, 16
    planes = 8

    def max_err(out_bf16, ref_f32):
        # kernel emits bf16; compare against the bf16-rounded reference
        ref_bf = ref_f32.astype(jnp.bfloat16).astype(jnp.float32)
        return float(jnp.max(jnp.abs(out_bf16.astype(jnp.float32) - ref_bf)))

    # case 1: projection shortcut (in_planes != planes -> 1x1 conv + BN)
    x1 = jax.random.normal(k_x1, (N, Cin, H, W), jnp.float32)
    p1 = make_params(k_p1, Cin, planes, stride=1)
    out1 = jax.block_until_ready(basic_block(x1, p1, stride=1))
    ref1 = jax.block_until_ready(reference_forward(x1, p1))
    assert out1.shape == (N, planes, H, W)
    err1 = max_err(out1, ref1)
    assert err1 < 8e-2, f"projection-shortcut max err {err1}"

    # case 2: identity shortcut (in_planes == planes -> no projection matmul)
    x2 = jax.random.normal(k_x2, (N, planes, H, W), jnp.float32)
    p2 = make_params(k_p2, planes, planes, stride=1)
    out2 = jax.block_until_ready(basic_block(x2, p2, stride=1))
    ref2 = jax.block_until_ready(reference_forward(x2, p2))
    assert out2.shape == (N, planes, H, W)
    err2 = max_err(out2, ref2)
    assert err2 < 8e-2, f"identity-shortcut max err {err2}"

    print("KERNEL_OK")
</pallas_src>

<mosaic_0001>
module attributes {stable_mosaic.version = 11 : i64} {
  func.func @_basic_block_kernel(%arg0: i32, %arg1: memref<32x64xbf16, #tpu.memory_space<vmem>>, %arg2: memref<32x2xf32, #tpu.memory_space<vmem>>, %arg3: memref<64x384xbf16, #tpu.memory_space<vmem>>, %arg4: memref<128x384xbf16, #tpu.memory_space<vmem>>, %arg5: memref<6x128xf32, #tpu.memory_space<vmem>>, %arg6: memref<64x128xbf16, #tpu.memory_space<vmem>>, %arg7: memref<32x128xbf16, #tpu.memory_space<vmem>>) attributes {dimension_semantics = [#tpu.dimension_semantics<parallel>], iteration_bounds = array<i64: 1>, scalar_prefetch = 0 : i64, scratch_operands = 0 : i64, tpu.core_type = #tpu.core_type<tc>, window_params = [{transform_indices = @transform_0, window_bounds = array<i64: 32, 64>}, {pipeline_mode = #tpu.pipeline_mode<synchronous>, transform_indices = @transform_1, window_bounds = array<i64: 32, 2>}, {pipeline_mode = #tpu.pipeline_mode<synchronous>, transform_indices = @transform_2, window_bounds = array<i64: 64, 384>}, {pipeline_mode = #tpu.pipeline_mode<synchronous>, transform_indices = @transform_3, window_bounds = array<i64: 128, 384>}, {pipeline_mode = #tpu.pipeline_mode<synchronous>, transform_indices = @transform_4, window_bounds = array<i64: 6, 128>}, {pipeline_mode = #tpu.pipeline_mode<synchronous>, transform_indices = @transform_5, window_bounds = array<i64: 64, 128>}, {transform_indices = @transform_6, window_bounds = array<i64: 32, 128>}]} {
    %c0 = arith.constant 0 : index
    %c0_0 = arith.constant 0 : index
    %0 = vector.load %arg1[%c0, %c0_0] : memref<32x64xbf16, #tpu.memory_space<vmem>>, vector<32x64xbf16>
    %c0_1 = arith.constant 0 : index
    %c0_2 = arith.constant 0 : index
    %1 = vector.load %arg2[%c0_1, %c0_2] : memref<32x2xf32, #tpu.memory_space<vmem>>, vector<32x1xf32>
    %c0_3 = arith.constant 0 : index
    %c1 = arith.constant 1 : index
    %2 = vector.load %arg2[%c0_3, %c1] : memref<32x2xf32, #tpu.memory_space<vmem>>, vector<32x1xf32>
    %cst = arith.constant 0.000000e+00 : f32
    %3 = vector.broadcast %cst : f32 to vector<1x128xf32>
    %c0_4 = arith.constant 0 : index
    %c0_5 = arith.constant 0 : index
    %4 = vector.load %arg5[%c0_4, %c0_5] : memref<6x128xf32, #tpu.memory_space<vmem>>, vector<1x128xf32>
    %c1_6 = arith.constant 1 : index
    %c0_7 = arith.constant 0 : index
    %5 = vector.load %arg5[%c1_6, %c0_7] : memref<6x128xf32, #tpu.memory_space<vmem>>, vector<1x128xf32>
    %c2 = arith.constant 2 : index
    %c0_8 = arith.constant 0 : index
    %6 = vector.load %arg5[%c2, %c0_8] : memref<6x128xf32, #tpu.memory_space<vmem>>, vector<1x128xf32>
    %c3 = arith.constant 3 : index
    %c0_9 = arith.constant 0 : index
    %7 = vector.load %arg5[%c3, %c0_9] : memref<6x128xf32, #tpu.memory_space<vmem>>, vector<1x128xf32>
    %c0_10 = arith.constant 0 : index
    %c0_11 = arith.constant 0 : index
    %8 = vector.load %arg3[%c0_10, %c0_11] : memref<64x384xbf16, #tpu.memory_space<vmem>>, vector<64x384xbf16>
    %cst_12 = arith.constant dense<0.000000e+00> : vector<32x384xf32>
    %9 = tpu.matmul %0, %8, %cst_12 {dimension_numbers = #tpu.dot_dimension_numbers<[1], [0], [0], [1], [0, 0, 1, 1], [], []>} : vector<32x64xbf16>, vector<64x384xbf16>, vector<32x384xf32> -> vector<32x384xf32>
    %10 = vector.extract_strided_slice %9 {offsets = [0, 0], sizes = [32, 128], strides = [1, 1]} : vector<32x384xf32> to vector<32x128xf32>
    %11 = vector.extract_strided_slice %9 {offsets = [0, 128], sizes = [32, 128], strides = [1, 1]} : vector<32x384xf32> to vector<32x128xf32>
    %12 = vector.extract_strided_slice %9 {offsets = [0, 256], sizes = [32, 128], strides = [1, 1]} : vector<32x384xf32> to vector<32x128xf32>
    %13 = vector.extract_strided_slice %10 {offsets = [0, 0], sizes = [31, 128], strides = [1, 1]} : vector<32x128xf32> to vector<31x128xf32>
    %14 = tpu.concatenate %3, %13 in 0 : vector<1x128xf32>, vector<31x128xf32> -> vector<32x128xf32>
    %15 = vector.extract_strided_slice %12 {offsets = [1, 0], sizes = [31, 128], strides = [1, 1]} : vector<32x128xf32> to vector<31x128xf32>
    %16 = tpu.concatenate %15, %3 in 0 : vector<31x128xf32>, vector<1x128xf32> -> vector<32x128xf32>
    %17 = vector.broadcast %1 : vector<32x1xf32> to vector<32x128xf32>
    %18 = arith.mulf %17, %14 : vector<32x128xf32>
    %19 = arith.addf %11, %18 : vector<32x128xf32>
    %20 = vector.broadcast %2 : vector<32x1xf32> to vector<32x128xf32>
    %21 = arith.mulf %20, %16 : vector<32x128xf32>
    %22 = arith.addf %19, %21 : vector<32x128xf32>
    %23 = vector.broadcast %4 : vector<1x128xf32> to vector<32x128xf32>
    %24 = arith.mulf %22, %23 : vector<32x128xf32>
    %25 = vector.broadcast %5 : vector<1x128xf32> to vector<32x128xf32>
    %26 = arith.addf %24, %25 : vector<32x128xf32>
    %cst_13 = arith.constant 0.000000e+00 : f32
    %27 = vector.broadcast %cst_13 : f32 to vector<32x128xf32>
    %28 = arith.maximumf %26, %27 : vector<32x128xf32>
    %29 = arith.truncf %28 : vector<32x128xf32> to vector<32x128xbf16>
    %c0_14 = arith.constant 0 : index
    %c0_15 = arith.constant 0 : index
    %30 = vector.load %arg4[%c0_14, %c0_15] : memref<128x384xbf16, #tpu.memory_space<vmem>>, vector<128x384xbf16>
    %cst_16 = arith.constant dense<0.000000e+00> : vector<32x384xf32>
    %31 = tpu.matmul %29, %30, %cst_16 {dimension_numbers = #tpu.dot_dimension_numbers<[1], [0], [0], [1], [0, 0, 1, 1], [], []>} : vector<32x128xbf16>, vector<128x384xbf16>, vector<32x384xf32> -> vector<32x384xf32>
    %32 = vector.extract_strided_slice %31 {offsets = [0, 0], sizes = [32, 128], strides = [1, 1]} : vector<32x384xf32> to vector<32x128xf32>
    %33 = vector.extract_strided_slice %31 {offsets = [0, 128], sizes = [32, 128], strides = [1, 1]} : vector<32x384xf32> to vector<32x128xf32>
    %34 = vector.extract_strided_slice %31 {offsets = [0, 256], sizes = [32, 128], strides = [1, 1]} : vector<32x384xf32> to vector<32x128xf32>
    %35 = vector.extract_strided_slice %32 {offsets = [0, 0], sizes = [31, 128], strides = [1, 1]} : vector<32x128xf32> to vector<31x128xf32>
    %36 = tpu.concatenate %3, %35 in 0 : vector<1x128xf32>, vector<31x128xf32> -> vector<32x128xf32>
    %37 = vector.extract_strided_slice %34 {offsets = [1, 0], sizes = [31, 128], strides = [1, 1]} : vector<32x128xf32> to vector<31x128xf32>
    %38 = tpu.concatenate %37, %3 in 0 : vector<31x128xf32>, vector<1x128xf32> -> vector<32x128xf32>
    %39 = vector.broadcast %1 : vector<32x1xf32> to vector<32x128xf32>
    %40 = arith.mulf %39, %36 : vector<32x128xf32>
    %41 = arith.addf %33, %40 : vector<32x128xf32>
    %42 = vector.broadcast %2 : vector<32x1xf32> to vector<32x128xf32>
    %43 = arith.mulf %42, %38 : vector<32x128xf32>
    %44 = arith.addf %41, %43 : vector<32x128xf32>
    %45 = vector.broadcast %6 : vector<1x128xf32> to vector<32x128xf32>
    %46 = arith.mulf %44, %45 : vector<32x128xf32>
    %47 = vector.broadcast %7 : vector<1x128xf32> to vector<32x128xf32>
    %48 = arith.addf %46, %47 : vector<32x128xf32>
    %c0_17 = arith.constant 0 : index
    %c0_18 = arith.constant 0 : index
    %49 = vector.load %arg6[%c0_17, %c0_18] : memref<64x128xbf16, #tpu.memory_space<vmem>>, vector<64x128xbf16>
    %cst_19 = arith.constant dense<0.000000e+00> : vector<32x128xf32>
    %50 = tpu.matmul %0, %49, %cst_19 {dimension_numbers = #tpu.dot_dimension_numbers<[1], [0], [0], [1], [0, 0, 1, 1], [], []>} : vector<32x64xbf16>, vector<64x128xbf16>, vector<32x128xf32> -> vector<32x128xf32>
    %c4 = arith.constant 4 : index
    %c0_20 = arith.constant 0 : index
    %51 = vector.load %arg5[%c4, %c0_20] : memref<6x128xf32, #tpu.memory_space<vmem>>, vector<1x128xf32>
    %52 = vector.broadcast %51 : vector<1x128xf32> to vector<32x128xf32>
    %53 = arith.mulf %50, %52 : vector<32x128xf32>
    %c5 = arith.constant 5 : index
    %c0_21 = arith.constant 0 : index
    %54 = vector.load %arg5[%c5, %c0_21] : memref<6x128xf32, #tpu.memory_space<vmem>>, vector<1x128xf32>
    %55 = vector.broadcast %54 : vector<1x128xf32> to vector<32x128xf32>
    %56 = arith.addf %53, %55 : vector<32x128xf32>
    %57 = arith.addf %48, %56 : vector<32x128xf32>
    %cst_22 = arith.constant 0.000000e+00 : f32
    %58 = vector.broadcast %cst_22 : f32 to vector<32x128xf32>
    %59 = arith.maximumf %57, %58 : vector<32x128xf32>
    %60 = arith.truncf %59 : vector<32x128xf32> to vector<32x128xbf16>
    %c0_23 = arith.constant 0 : index
    %c0_24 = arith.constant 0 : index
    %61 = vector.load %arg7[%c0_23, %c0_24] : memref<32x128xbf16, #tpu.memory_space<vmem>>, vector<32x128xbf16>
    tpu.vector_store %arg7[%c0_23, %c0_24], %60 {strides = array<i32>} : memref<32x128xbf16, #tpu.memory_space<vmem>>, vector<32x128xbf16>,
    return
  }
  func.func @transform_0(%arg0: i32) -> (i32, i32) {
    %c0_i32 = arith.constant 0 : i32
    %c0_i32_0 = arith.constant 0 : i32
    return %arg0, %c0_i32 : i32, i32
  }
  func.func @transform_1(%arg0: i32) -> (i32, i32) {
    %c0_i32 = arith.constant 0 : i32
    %c0_i32_0 = arith.constant 0 : i32
    %c0_i32_1 = arith.constant 0 : i32
    return %c0_i32, %c0_i32_0 : i32, i32
  }
  func.func @transform_2(%arg0: i32) -> (i32, i32) {
    %c0_i32 = arith.constant 0 : i32
    %c0_i32_0 = arith.constant 0 : i32
    %c0_i32_1 = arith.constant 0 : i32
    return %c0_i32, %c0_i32_0 : i32, i32
  }
  func.func @transform_3(%arg0: i32) -> (i32, i32) {
    %c0_i32 = arith.constant 0 : i32
    %c0_i32_0 = arith.constant 0 : i32
    %c0_i32_1 = arith.constant 0 : i32
    return %c0_i32, %c0_i32_0 : i32, i32
  }
  func.func @transform_4(%arg0: i32) -> (i32, i32) {
    %c0_i32 = arith.constant 0 : i32
    %c0_i32_0 = arith.constant 0 : i32
    %c0_i32_1 = arith.constant 0 : i32
    return %c0_i32, %c0_i32_0 : i32, i32
  }
  func.func @transform_5(%arg0: i32) -> (i32, i32) {
    %c0_i32 = arith.constant 0 : i32
    %c0_i32_0 = arith.constant 0 : i32
    %c0_i32_1 = arith.constant 0 : i32
    return %c0_i32, %c0_i32_0 : i32, i32
  }
  func.func @transform_6(%arg0: i32) -> (i32, i32) {
    %c0_i32 = arith.constant 0 : i32
    %c0_i32_0 = arith.constant 0 : i32
    return %arg0, %c0_i32 : i32, i32
  }
}

</mosaic_0001>

<llo_original>
// kernel: tpu_custom_call.1
$region0: #{tpu_custom_call.1}
  #allocation0 [shape = 'u32[]', space=smem, size = 0x4, offset = 0x4, fixed_abs, tag = 'smem constant byte address 0x4 - core index']
  #allocation1 [shape = 'u32[72,128]{1,0:T(1,128)}', space=vmem, size = 0x9000, scoped, tag = 'internal scratch']
  %s0 = inlined_call_operand.hbm [shape: bf16[32,64], index: 0, kind: input, shape index: {}]
  %s1 = inlined_call_operand.vmem [shape: f32[32,2], index: 1, kind: input, shape index: {}]
  %s2 = inlined_call_operand.hbm [shape: bf16[64,384], index: 2, kind: input, shape index: {}]
  %s3 = inlined_call_operand.hbm [shape: bf16[128,384], index: 3, kind: input, shape index: {}]
  %s4 = inlined_call_operand.hbm [shape: f32[6,128], index: 4, kind: input, shape index: {}]
  %s5 = inlined_call_operand.vmem [shape: bf16[64,128], index: 5, kind: input, shape index: {}]
  %s6 = inlined_call_operand.hbm [shape: bf16[32,128], index: 6, kind: output, shape index: {}]
  %s7 = sld [smem:[#allocation0]]
  $region50: #{tpu_custom_call.1} parent=0
    _
  %s9 = ssub.s32 1, %s7
  %s10 = scalar_select 0, %s9, %s7
  $region1: #{tpu_custom_call.1} parent=0
    #allocation2 [shape = 'u8[8192]{0}', space=vmem, size = 0x2000, scoped, tag = 'input window, operand 0, single buffered']
    #allocation3 [shape = 's32[1]{0}', space=sflag, size = 0x4, scoped, tag = 'scoped memory for tpu_custom_call.1']
    #allocation4 [shape = 's32[1]{0}', space=sflag, size = 0x4, scoped, tag = 'scoped memory for tpu_custom_call.1']
    #allocation5 [shape = 'u8[49152]{0}', space=vmem, size = 0xc000, scoped, tag = 'input window, operand 2, single buffered']
    #allocation6 [shape = 's32[1]{0}', space=sflag, size = 0x4, scoped, tag = 'scoped memory for tpu_custom_call.1']
    #allocation7 [shape = 'u8[98304]{0}', space=vmem, size = 0x18000, scoped, tag = 'input window, operand 3, single buffered']
    #allocation8 [shape = 'u8[4096]{0}', space=vmem, size = 0x1000, scoped, tag = 'input window, operand 4, single buffered']
    #allocation9 [shape = 's32[1]{0}', space=sflag, size = 0x4, scoped, tag = 'scoped memory for tpu_custom_call.1']
    #allocation10 [shape = 'u8[8192]{0}', space=vmem, size = 0x2000, scoped, tag = 'output window, operand 0, single buffered']
    %11 = vsyncpa [#allocation3], 0
    %12 = vsyncpa [#allocation6], 0
    %13 = vsyncpa [#allocation9], 0
    %14 = vsyncpa [#allocation4], 0
    // Predicated region
    $region2: #{tpu_custom_call.1} parent=1 // pred_check
      _
    $region3: #{tpu_custom_call.1} parent=1 // pred_check_branch
      %16 = sbr.rel (0) target = $region5
    $region4: #{tpu_custom_call.1} parent=1 // pred_region
      %18 = vsyncadd [#allocation3], 0
      %s19 = sshll.u32 %s0, 4
      %s20 = int_to_ptr.hbm [resolvable:$true] %s19
      %s21 = sshll.u32 [#allocation2], 4
      %s22 = int_to_ptr.vmem [resolvable:$true] %s21
      %27 = dma.hbm_to_vmem [thread:$0]  %s20, 256, %s22, [#allocation3], 64, 64, 4
    $region5: #{tpu_custom_call.1} parent=1 // pred_fallthru
      _
    // Predicated region
    $region6: #{tpu_custom_call.1} parent=1 // pred_check
      _
    $region7: #{tpu_custom_call.1} parent=1 // pred_check_branch
      %29 = sbr.rel (0) target = $region9
    $region8: #{tpu_custom_call.1} parent=1 // pred_region
      _
    $region9: #{tpu_custom_call.1} parent=1 // pred_fallthru
      _
    // Predicated region
    $region10: #{tpu_custom_call.1} parent=1 // pred_check
      _
    $region11: #{tpu_custom_call.1} parent=1 // pred_check_branch
      %31 = sbr.rel (0) target = $region13
    $region12: #{tpu_custom_call.1} parent=1 // pred_region
      %33 = vsyncadd [#allocation6], 0
      %s34 = sshll.u32 %s2, 4
      %s35 = int_to_ptr.hbm [resolvable:$true] %s34
      %s36 = sshll.u32 [#allocation5], 4
      %s37 = int_to_ptr.vmem [resolvable:$true] %s36
      %42 = dma.hbm_to_vmem [thread:$0]  %s35, 1536, %s37, [#allocation6], 192, 192, 12
    $region13: #{tpu_custom_call.1} parent=1 // pred_fallthru
      _
    // Predicated region
    $region14: #{tpu_custom_call.1} parent=1 // pred_check
      _
    $region15: #{tpu_custom_call.1} parent=1 // pred_check_branch
      %44 = sbr.rel (0) target = $region17
    $region16: #{tpu_custom_call.1} parent=1 // pred_region
      %46 = vsyncadd [#allocation6], 0
      %s47 = sshll.u32 %s3, 4
      %s48 = int_to_ptr.hbm [resolvable:$true] %s47
      %s49 = sshll.u32 [#allocation7], 4
      %s50 = int_to_ptr.vmem [resolvable:$true] %s49
      %55 = dma.hbm_to_vmem [thread:$0]  %s48, 3072, %s50, [#allocation6], 192, 192, 12
    $region17: #{tpu_custom_call.1} parent=1 // pred_fallthru
      _
    // Predicated region
    $region18: #{tpu_custom_call.1} parent=1 // pred_check
      _
    $region19: #{tpu_custom_call.1} parent=1 // pred_check_branch
      %57 = sbr.rel (0) target = $region21
    $region20: #{tpu_custom_call.1} parent=1 // pred_region
      %59 = vsyncadd [#allocation9], 0
      %s61 = sshll.u32 %s4, 4
      %s62 = int_to_ptr.hbm [resolvable:$true] %s61
      %s63 = sshll.u32 [#allocation8], 4
      %s64 = int_to_ptr.vmem [resolvable:$true] %s63
      %66 = dma.hbm_to_vmem [thread:$0]  %s62, 128, %s64, [#allocation9]
    $region21: #{tpu_custom_call.1} parent=1 // pred_fallthru
      _
    // Predicated region
    $region22: #{tpu_custom_call.1} parent=1 // pred_check
      _
    $region23: #{tpu_custom_call.1} parent=1 // pred_check_branch
      %68 = sbr.rel (0) target = $region25
    $region24: #{tpu_custom_call.1} parent=1 // pred_region
      _
    $region25: #{tpu_custom_call.1} parent=1 // pred_fallthru
      _
    // Predicated region
    $region26: #{tpu_custom_call.1} parent=1 // pred_check
      _
    $region27: #{tpu_custom_call.1} parent=1 // pred_check_branch
      %70 = sbr.rel (0) target = $region29
    $region28: #{tpu_custom_call.1} parent=1 // pred_region
      %72 = dma.done [#allocation3], 256
    $region29: #{tpu_custom_call.1} parent=1 // pred_fallthru
      _
    // Predicated region
    $region30: #{tpu_custom_call.1} parent=1 // pred_check
      _
    $region31: #{tpu_custom_call.1} parent=1 // pred_check_branch
      %74 = sbr.rel (0) target = $region33
    $region32: #{tpu_custom_call.1} parent=1 // pred_region
      %76 = dma.done [#allocation6], 1536
    $region33: #{tpu_custom_call.1} parent=1 // pred_fallthru
      _
    // Predicated region
    $region34: #{tpu_custom_call.1} parent=1 // pred_check
      _
    $region35: #{tpu_custom_call.1} parent=1 // pred_check_branch
      %78 = sbr.rel (0) target = $region37
    $region36: #{tpu_custom_call.1} parent=1 // pred_region
      %80 = dma.done [#allocation6], 3072
    $region37: #{tpu_custom_call.1} parent=1 // pred_fallthru
      _
    // Predicated region
    $region38: #{tpu_custom_call.1} parent=1 // pred_check
      _
    $region39: #{tpu_custom_call.1} parent=1 // pred_check_branch
      %82 = sbr.rel (0) target = $region41
    $region40: #{tpu_custom_call.1} parent=1 // pred_region
      %84 = dma.done [#allocation9], 128
    $region41: #{tpu_custom_call.1} parent=1 // pred_fallthru
      _
    %v86 = vld [vmem:[#allocation2] sm:$0xf]
    %v87 = vld [vmem:[#allocation2 + $0x4] sm:$0xf]
    %v88 = vld [vmem:[#allocation2 + $0x8] sm:$0xf]
    %v89 = vld [vmem:[#allocation2 + $0xc] sm:$0xf]
    %v90 = vld [vmem:[%s1] sm:$0xff]
    %v91 = vld [vmem:[%s1 + $0x8] sm:$0xff]
    %v92 = vld [vmem:[%s1 + $0x10] sm:$0xff]
    %v93 = vld [vmem:[%s1 + $0x18] sm:$0xff]
    %v94 = vld [vmem:[#allocation8] sm:$0x1]
    %v95 = vld [vmem:[#allocation8 + $0x1] sm:$0x1]
    %v96 = vld [vmem:[#allocation8 + $0x2] sm:$0x1]
    %v97 = vld [vmem:[#allocation8 + $0x3] sm:$0x1]
    %v98 = vld [vmem:[#allocation5] sm:$0xff]
    %v99 = vld [vmem:[#allocation5 + $0x8] sm:$0xf]
    %v100 = vld [vmem:[#allocation5 + $0xc] sm:$0xff]
    %v101 = vld [vmem:[#allocation5 + $0x14] sm:$0xf]
    %v102 = vld [vmem:[#allocation5 + $0x18] sm:$0xff]
    %v103 = vld [vmem:[#allocation5 + $0x20] sm:$0xf]
    %v104 = vld [vmem:[#allocation5 + $0x24] sm:$0xff]
    %v105 = vld [vmem:[#allocation5 + $0x2c] sm:$0xf]
    %v106 = vld [vmem:[#allocation5 + $0x30] sm:$0xff]
    %v107 = vld [vmem:[#allocation5 + $0x38] sm:$0xf]
    %v108 = vld [vmem:[#allocation5 + $0x3c] sm:$0xff]
    %v109 = vld [vmem:[#allocation5 + $0x44] sm:$0xf]
    %v110 = vld [vmem:[#allocation5 + $0x48] sm:$0xff]
    %v111 = vld [vmem:[#allocation5 + $0x50] sm:$0xf]
    %v112 = vld [vmem:[#allocation5 + $0x54] sm:$0xff]
    %v113 = vld [vmem:[#allocation5 + $0x5c] sm:$0xf]
    %v118 = vunpack.c.l.b16 %v86
    %v119 = vunpack.c.l.b16 %v87
    %v120 = vunpack.c.l.b16 %v88
    %v121 = vunpack.c.l.b16 %v89
    %v122 = vpack.c.b16 %v119, %v118
    %v123 = vpack.c.b16 %v121, %v120
    %v140 = vunpack.c.l.b16 %v98
    %v141 = vunpack.c.h.b16 %v98
    %v142 = vunpack.c.l.b16 %v99
    %v143 = vunpack.c.l.b16 %v100
    %v144 = vunpack.c.h.b16 %v100
    %v145 = vunpack.c.l.b16 %v101
    %v146 = vunpack.c.l.b16 %v102
    %v147 = vunpack.c.h.b16 %v102
    %v148 = vunpack.c.l.b16 %v103
    %v149 = vunpack.c.l.b16 %v104
    %v150 = vunpack.c.h.b16 %v104
    %v151 = vunpack.c.l.b16 %v105
    %v152 = vunpack.c.l.b16 %v106
    %v153 = vunpack.c.h.b16 %v106
    %v154 = vunpack.c.l.b16 %v107
    %v155 = vunpack.c.l.b16 %v108
    %v156 = vunpack.c.h.b16 %v108
    %v157 = vunpack.c.l.b16 %v109
    %v158 = vunpack.c.l.b16 %v110
    %v159 = vunpack.c.h.b16 %v110
    %v160 = vunpack.c.l.b16 %v111
    %v161 = vunpack.c.l.b16 %v112
    %v162 = vunpack.c.h.b16 %v112
    %v163 = vunpack.c.l.b16 %v113
    %v164 = vpack.c.b16 %v143, %v140
    %v165 = vpack.c.b16 %v144, %v141
    %v166 = vpack.c.b16 %v145, %v142
    %v167 = vpack.c.b16 %v149, %v146
    %v168 = vpack.c.b16 %v150, %v147
    %v169 = vpack.c.b16 %v151, %v148
    %v170 = vpack.c.b16 %v155, %v152
    %v171 = vpack.c.b16 %v156, %v153
    %v172 = vpack.c.b16 %v157, %v154
    %v173 = vpack.c.b16 %v161, %v158
    %v174 = vpack.c.b16 %v162, %v159
    %v175 = vpack.c.b16 %v163, %v160
    %vm188 = vcmask 523264
    %v190 = vsel %vm188, %v122, 0
    %v193 = vsel %vm188, %v123, 0
    %195 = vmatpush.bf16.msra.mxu0 0
    %196 = vmatpush.bf16.msra.mxu0 0
    %197 = vmatpush.bf16.msra.mxu0 0
    %198 = vmatpush.bf16.msra.mxu0 0
    %199 = vmatpush.bf16.msra.mxu0 %v173
    %200 = vmatpush.bf16.msra.mxu0 %v170
    %201 = vmatpush.bf16.msra.mxu0 %v167
    %202 = vmatpush.bf16.msra.mxu0 %v164
    %203 = vmatmul.bf16.gmra.mxu0 %v190
    %v204 = vpop.f32.mrf.mxu0
    %v205 = vadd.f32 0.0, %v204
    %v206 = vpop.f32.mrf.mxu0
    %v207 = vadd.f32 0.0, %v206
    %208 = vmatmul.bf16.gmra.mxu0 %v193
    %v209 = vpop.f32.mrf.mxu0
    %v210 = vadd.f32 0.0, %v209
    %v211 = vpop.f32.mrf.mxu0
    %v212 = vadd.f32 0.0, %v211
    %213 = vdwg.mxu0
    %214 = vmatpush.bf16.msra.mxu0 0
    %215 = vmatpush.bf16.msra.mxu0 0
    %216 = vmatpush.bf16.msra.mxu0 0
    %217 = vmatpush.bf16.msra.mxu0 0
    %218 = vmatpush.bf16.msra.mxu0 %v174
    %219 = vmatpush.bf16.msra.mxu0 %v171
    %220 = vmatpush.bf16.msra.mxu0 %v168
    %221 = vmatpush.bf16.msra.mxu0 %v165
    %222 = vmatmul.bf16.gmra.mxu0 %v190
    %v223 = vpop.f32.mrf.mxu0
    %v224 = vadd.f32 0.0, %v223
    %v225 = vpop.f32.mrf.mxu0
    %v226 = vadd.f32 0.0, %v225
    %227 = vmatmul.bf16.gmra.mxu0 %v193
    %v228 = vpop.f32.mrf.mxu0
    %v229 = vadd.f32 0.0, %v228
    %v230 = vpop.f32.mrf.mxu0
    %v231 = vadd.f32 0.0, %v230
    %232 = vdwg.mxu0
    %233 = vmatpush.bf16.msra.mxu0 0
    %234 = vmatpush.bf16.msra.mxu0 0
    %235 = vmatpush.bf16.msra.mxu0 0
    %236 = vmatpush.bf16.msra.mxu0 0
    %237 = vmatpush.bf16.msra.mxu0 %v175
    %238 = vmatpush.bf16.msra.mxu0 %v172
    %239 = vmatpush.bf16.msra.mxu0 %v169
    %240 = vmatpush.bf16.msra.mxu0 %v166
    %241 = vmatmul.bf16.gmra.mxu0 %v190
    %v242 = vpop.f32.mrf.mxu0
    %v243 = vadd.f32 0.0, %v242
    %v244 = vpop.f32.mrf.mxu0
    %v245 = vadd.f32 0.0, %v244
    %246 = vmatmul.bf16.gmra.mxu0 %v193
    %v247 = vpop.f32.mrf.mxu0
    %v248 = vadd.f32 0.0, %v247
    %v249 = vpop.f32.mrf.mxu0
    %v250 = vadd.f32 0.0, %v249
    %251 = vdwg.mxu0
    %vm256 = vcmask 1040384
    %v257 = vrot.slane %v205, 7
    %v258 = vrot.slane %v207, 7
    %v259 = vsel %vm256, %v257, %v258
    %v260 = vrot.slane %v210, 7
    %v261 = vsel %vm256, %v258, %v260
    %v262 = vrot.slane %v212, 7
    %v263 = vsel %vm256, %v260, %v262
    %v268 = vsel %vm256, 0.0, %v257
    %vm273 = vcmask 1046528
    %v274 = vrot.slane %v243, 1
    %v275 = vrot.slane %v245, 1
    %v276 = vsel %vm273, %v274, %v275
    %v277 = vrot.slane %v248, 1
    %v278 = vsel %vm273, %v275, %v277
    %v279 = vrot.slane %v250, 1
    %v280 = vsel %vm273, %v277, %v279
    %v285 = vsel %vm273, %v279, 0.0
    %287 = vset.pattern.permute.xlu0 0
    %288 = vperm.xlu0 %287, %v90
    %v289 = vpop.permute.xlu0 %288
    %292 = vset.pattern.permute.xlu0 0
    %293 = vperm.xlu0 %292, %v91
    %v294 = vpop.permute.xlu0 %293
    %297 = vset.pattern.permute.xlu0 0
    %298 = vperm.xlu0 %297, %v92
    %v299 = vpop.permute.xlu0 %298
    %302 = vset.pattern.permute.xlu0 0
    %303 = vperm.xlu0 %302, %v93
    %v304 = vpop.permute.xlu0 %303
    %v306 = vmul.f32 %v289, %v268
    %v307 = vmul.f32 %v294, %v259
    %v308 = vmul.f32 %v299, %v261
    %v309 = vmul.f32 %v304, %v263
    %v310 = vadd.f32 %v224, %v306
    %v311 = vadd.f32 %v226, %v307
    %v312 = vadd.f32 %v229, %v308
    %v313 = vadd.f32 %v231, %v309
    %314 = vset.pattern.permute.xlu0 1
    %315 = vperm.xlu0 %314, %v90
    %v316 = vpop.permute.xlu0 %315
    %318 = vset.pattern.permute.xlu0 1
    %319 = vperm.xlu0 %318, %v91
    %v320 = vpop.permute.xlu0 %319
    %322 = vset.pattern.permute.xlu0 1
    %323 = vperm.xlu0 %322, %v92
    %v324 = vpop.permute.xlu0 %323
    %326 = vset.pattern.permute.xlu0 1
    %327 = vperm.xlu0 %326, %v93
    %v328 = vpop.permute.xlu0 %327
    %v330 = vmul.f32 %v316, %v276
    %v331 = vmul.f32 %v320, %v278
    %v332 = vmul.f32 %v324, %v280
    %v333 = vmul.f32 %v328, %v285
    %v334 = vadd.f32 %v310, %v330
    %v335 = vadd.f32 %v311, %v331
    %v336 = vadd.f32 %v312, %v332
    %v337 = vadd.f32 %v313, %v333
    %v338 = vperm.slane %v94, 0
    %v339 = vmul.f32 %v334, %v338
    %v340 = vmul.f32 %v335, %v338
    %v341 = vmul.f32 %v336, %v338
    %v342 = vmul.f32 %v337, %v338
    %v343 = vperm.slane %v95, 0
    %v344 = vadd.f32 %v339, %v343
    %v345 = vadd.f32 %v340, %v343
    %v346 = vadd.f32 %v341, %v343
    %v347 = vadd.f32 %v342, %v343
    %v348 = vmax.f32 %v344, 0.0
    %v349 = vmax.f32 %v345, 0.0
    %v350 = vmax.f32 %v346, 0.0
    %v351 = vmax.f32 %v347, 0.0
    %v352 = vpack.c.bf16 %v349, %v348
    %v353 = vpack.c.bf16 %v351, %v350
    %v354 = vld [vmem:[#allocation7] sm:$0xff]
    %v355 = vld [vmem:[#allocation7 + $0x8] sm:$0xf]
    %v356 = vld [vmem:[#allocation7 + $0xc] sm:$0xff]
    %v357 = vld [vmem:[#allocation7 + $0x14] sm:$0xf]
    %v358 = vld [vmem:[#allocation7 + $0x18] sm:$0xff]
    %v359 = vld [vmem:[#allocation7 + $0x20] sm:$0xf]
    %v360 = vld [vmem:[#allocation7 + $0x24] sm:$0xff]
    %v361 = vld [vmem:[#allocation7 + $0x2c] sm:$0xf]
    %v362 = vld [vmem:[#allocation7 + $0x30] sm:$0xff]
    %v363 = vld [vmem:[#allocation7 + $0x38] sm:$0xf]
    %v364 = vld [vmem:[#allocation7 + $0x3c] sm:$0xff]
    %v365 = vld [vmem:[#allocation7 + $0x44] sm:$0xf]
    %v366 = vld [vmem:[#allocation7 + $0x48] sm:$0xff]
    %v367 = vld [vmem:[#allocation7 + $0x50] sm:$0xf]
    %v368 = vld [vmem:[#allocation7 + $0x54] sm:$0xff]
    %v369 = vld [vmem:[#allocation7 + $0x5c] sm:$0xf]
    %v370 = vld [vmem:[#allocation7 + $0x60] sm:$0xff]
    %v371 = vld [vmem:[#allocation7 + $0x68] sm:$0xf]
    %v372 = vld [vmem:[#allocation7 + $0x6c] sm:$0xff]
    %v373 = vld [vmem:[#allocation7 + $0x74] sm:$0xf]
    %v374 = vld [vmem:[#allocation7 + $0x78] sm:$0xff]
    %v375 = vld [vmem:[#allocation7 + $0x80] sm:$0xf]
    %v376 = vld [vmem:[#allocation7 + $0x84] sm:$0xff]
    %v377 = vld [vmem:[#allocation7 + $0x8c] sm:$0xf]
    %v378 = vld [vmem:[#allocation7 + $0x90] sm:$0xff]
    %v379 = vld [vmem:[#allocation7 + $0x98] sm:$0xf]
    %v380 = vld [vmem:[#allocation7 + $0x9c] sm:$0xff]
    %v381 = vld [vmem:[#allocation7 + $0xa4] sm:$0xf]
    %v382 = vld [vmem:[#allocation7 + $0xa8] sm:$0xff]
    %v383 = vld [vmem:[#allocation7 + $0xb0] sm:$0xf]
    %v384 = vld [vmem:[#allocation7 + $0xb4] sm:$0xff]
    %v385 = vld [vmem:[#allocation7 + $0xbc] sm:$0xf]
    %v418 = vunpack.c.l.b16 %v354
    %v419 = vunpack.c.h.b16 %v354
    %v420 = vunpack.c.l.b16 %v355
    %v421 = vunpack.c.l.b16 %v356
    %v422 = vunpack.c.h.b16 %v356
    %v423 = vunpack.c.l.b16 %v357
    %v424 = vunpack.c.l.b16 %v358
    %v425 = vunpack.c.h.b16 %v358
    %v426 = vunpack.c.l.b16 %v359
    %v427 = vunpack.c.l.b16 %v360
    %v428 = vunpack.c.h.b16 %v360
    %v429 = vunpack.c.l.b16 %v361
    %v430 = vunpack.c.l.b16 %v362
    %v431 = vunpack.c.h.b16 %v362
    %v432 = vunpack.c.l.b16 %v363
    %v433 = vunpack.c.l.b16 %v364
    %v434 = vunpack.c.h.b16 %v364
    %v435 = vunpack.c.l.b16 %v365
    %v436 = vunpack.c.l.b16 %v366
    %v437 = vunpack.c.h.b16 %v366
    %v438 = vunpack.c.l.b16 %v367
    %v439 = vunpack.c.l.b16 %v368
    %v440 = vunpack.c.h.b16 %v368
    %v441 = vunpack.c.l.b16 %v369
    %v442 = vunpack.c.l.b16 %v370
    %v443 = vunpack.c.h.b16 %v370
    %v444 = vunpack.c.l.b16 %v371
    %v445 = vunpack.c.l.b16 %v372
    %v446 = vunpack.c.h.b16 %v372
    %v447 = vunpack.c.l.b16 %v373
    %v448 = vunpack.c.l.b16 %v374
    %v449 = vunpack.c.h.b16 %v374
    %v450 = vunpack.c.l.b16 %v375
    %v451 = vunpack.c.l.b16 %v376
    %v452 = vunpack.c.h.b16 %v376
    %v453 = vunpack.c.l.b16 %v377
    %v454 = vunpack.c.l.b16 %v378
    %v455 = vunpack.c.h.b16 %v378
    %v456 = vunpack.c.l.b16 %v379
    %v457 = vunpack.c.l.b16 %v380
    %v458 = vunpack.c.h.b16 %v380
    %v459 = vunpack.c.l.b16 %v381
    %v460 = vunpack.c.l.b16 %v382
    %v461 = vunpack.c.h.b16 %v382
    %v462 = vunpack.c.l.b16 %v383
    %v463 = vunpack.c.l.b16 %v384
    %v464 = vunpack.c.h.b16 %v384
    %v465 = vunpack.c.l.b16 %v385
    %v466 = vpack.c.b16 %v421, %v418
    %v467 = vpack.c.b16 %v422, %v419
    %v468 = vpack.c.b16 %v423, %v420
    %v469 = vpack.c.b16 %v427, %v424
    %v470 = vpack.c.b16 %v428, %v425
    %v471 = vpack.c.b16 %v429, %v426
    %v472 = vpack.c.b16 %v433, %v430
    %v473 = vpack.c.b16 %v434, %v431
    %v474 = vpack.c.b16 %v435, %v432
    %v475 = vpack.c.b16 %v439, %v436
    %v476 = vpack.c.b16 %v440, %v437
    %v477 = vpack.c.b16 %v441, %v438
    %v478 = vpack.c.b16 %v445, %v442
    %v479 = vpack.c.b16 %v446, %v443
    %v480 = vpack.c.b16 %v447, %v444
    %v481 = vpack.c.b16 %v451, %v448
    %v482 = vpack.c.b16 %v452, %v449
    %v483 = vpack.c.b16 %v453, %v450
    %v484 = vpack.c.b16 %v457, %v454
    %v485 = vpack.c.b16 %v458, %v455
    %v486 = vpack.c.b16 %v459, %v456
    %v487 = vpack.c.b16 %v463, %v460
    %v488 = vpack.c.b16 %v464, %v461
    %v489 = vpack.c.b16 %v465, %v462
    %514 = vmatpush.bf16.msra.mxu0 %v487
    %515 = vmatpush.bf16.msra.mxu0 %v484
    %516 = vmatpush.bf16.msra.mxu0 %v481
    %517 = vmatpush.bf16.msra.mxu0 %v478
    %518 = vmatpush.bf16.msra.mxu0 %v475
    %519 = vmatpush.bf16.msra.mxu0 %v472
    %520 = vmatpush.bf16.msra.mxu0 %v469
    %521 = vmatpush.bf16.msra.mxu0 %v466
    %522 = vmatmul.bf16.gmra.mxu0 %v352
    %v523 = vpop.f32.mrf.mxu0
    %v524 = vadd.f32 0.0, %v523
    %v525 = vpop.f32.mrf.mxu0
    %v526 = vadd.f32 0.0, %v525
    %527 = vmatmul.bf16.gmra.mxu0 %v353
    %v528 = vpop.f32.mrf.mxu0
    %v529 = vadd.f32 0.0, %v528
    %v530 = vpop.f32.mrf.mxu0
    %v531 = vadd.f32 0.0, %v530
    %532 = vdwg.mxu0
    %533 = vmatpush.bf16.msra.mxu0 %v488
    %534 = vmatpush.bf16.msra.mxu0 %v485
    %535 = vmatpush.bf16.msra.mxu0 %v482
    %536 = vmatpush.bf16.msra.mxu0 %v479
    %537 = vmatpush.bf16.msra.mxu0 %v476
    %538 = vmatpush.bf16.msra.mxu0 %v473
    %539 = vmatpush.bf16.msra.mxu0 %v470
    %540 = vmatpush.bf16.msra.mxu0 %v467
    %541 = vmatmul.bf16.gmra.mxu0 %v352
    %v542 = vpop.f32.mrf.mxu0
    %v543 = vadd.f32 0.0, %v542
    %v544 = vpop.f32.mrf.mxu0
    %v545 = vadd.f32 0.0, %v544
    %546 = vmatmul.bf16.gmra.mxu0 %v353
    %v547 = vpop.f32.mrf.mxu0
    %v548 = vadd.f32 0.0, %v547
    %v549 = vpop.f32.mrf.mxu0
    %v550 = vadd.f32 0.0, %v549
    %551 = vdwg.mxu0
    %552 = vmatpush.bf16.msra.mxu0 %v489
    %553 = vmatpush.bf16.msra.mxu0 %v486
    %554 = vmatpush.bf16.msra.mxu0 %v483
    %555 = vmatpush.bf16.msra.mxu0 %v480
    %556 = vmatpush.bf16.msra.mxu0 %v477
    %557 = vmatpush.bf16.msra.mxu0 %v474
    %558 = vmatpush.bf16.msra.mxu0 %v471
    %559 = vmatpush.bf16.msra.mxu0 %v468
    %560 = vmatmul.bf16.gmra.mxu0 %v352
    %v561 = vpop.f32.mrf.mxu0
    %v562 = vadd.f32 0.0, %v561
    %v563 = vpop.f32.mrf.mxu0
    %v564 = vadd.f32 0.0, %v563
    %565 = vmatmul.bf16.gmra.mxu0 %v353
    %v566 = vpop.f32.mrf.mxu0
    %v567 = vadd.f32 0.0, %v566
    %v568 = vpop.f32.mrf.mxu0
    %v569 = vadd.f32 0.0, %v568
    %570 = vdwg.mxu0
    %v575 = vrot.slane %v524, 7
    %v576 = vrot.slane %v526, 7
    %v577 = vsel %vm256, %v575, %v576
    %v578 = vrot.slane %v529, 7
    %v579 = vsel %vm256, %v576, %v578
    %v580 = vrot.slane %v531, 7
    %v581 = vsel %vm256, %v578, %v580
    %v586 = vsel %vm256, 0.0, %v575
    %v591 = vrot.slane %v562, 1
    %v592 = vrot.slane %v564, 1
    %v593 = vsel %vm273, %v591, %v592
    %v594 = vrot.slane %v567, 1
    %v595 = vsel %vm273, %v592, %v594
    %v596 = vrot.slane %v569, 1
    %v597 = vsel %vm273, %v594, %v596
    %v602 = vsel %vm273, %v596, 0.0
    %v603 = vmul.f32 %v289, %v586
    %v604 = vmul.f32 %v294, %v577
    %v605 = vmul.f32 %v299, %v579
    %v606 = vmul.f32 %v304, %v581
    %v607 = vadd.f32 %v543, %v603
    %v608 = vadd.f32 %v545, %v604
    %v609 = vadd.f32 %v548, %v605
    %v610 = vadd.f32 %v550, %v606
    %v611 = vmul.f32 %v316, %v593
    %v612 = vmul.f32 %v320, %v595
    %v613 = vmul.f32 %v324, %v597
    %v614 = vmul.f32 %v328, %v602
    %v615 = vadd.f32 %v607, %v611
    %v616 = vadd.f32 %v608, %v612
    %v617 = vadd.f32 %v609, %v613
    %v618 = vadd.f32 %v610, %v614
    %v619 = vperm.slane %v96, 0
    %v620 = vmul.f32 %v615, %v619
    %v621 = vmul.f32 %v616, %v619
    %v622 = vmul.f32 %v617, %v619
    %v623 = vmul.f32 %v618, %v619
    %v624 = vperm.slane %v97, 0
    %v625 = vadd.f32 %v620, %v624
    %v626 = vadd.f32 %v621, %v624
    %v627 = vadd.f32 %v622, %v624
    %v628 = vadd.f32 %v623, %v624
    %v629 = vld [vmem:[%s5] sm:$0xf]
    %v630 = vld [vmem:[%s5 + $0x4] sm:$0xf]
    %v631 = vld [vmem:[%s5 + $0x8] sm:$0xf]
    %v632 = vld [vmem:[%s5 + $0xc] sm:$0xf]
    %v633 = vld [vmem:[%s5 + $0x10] sm:$0xf]
    %v634 = vld [vmem:[%s5 + $0x14] sm:$0xf]
    %v635 = vld [vmem:[%s5 + $0x18] sm:$0xf]
    %v636 = vld [vmem:[%s5 + $0x1c] sm:$0xf]
    %v645 = vunpack.c.l.b16 %v629
    %v646 = vunpack.c.l.b16 %v630
    %v647 = vunpack.c.l.b16 %v631
    %v648 = vunpack.c.l.b16 %v632
    %v649 = vunpack.c.l.b16 %v633
    %v650 = vunpack.c.l.b16 %v634
    %v651 = vunpack.c.l.b16 %v635
    %v652 = vunpack.c.l.b16 %v636
    %v653 = vpack.c.b16 %v646, %v645
    %v654 = vpack.c.b16 %v648, %v647
    %v655 = vpack.c.b16 %v650, %v649
    %v656 = vpack.c.b16 %v652, %v651
    %661 = vmatpush.bf16.msra.mxu0 0
    %662 = vmatpush.bf16.msra.mxu0 0
    %663 = vmatpush.bf16.msra.mxu0 0
    %664 = vmatpush.bf16.msra.mxu0 0
    %665 = vmatpush.bf16.msra.mxu0 %v656
    %666 = vmatpush.bf16.msra.mxu0 %v655
    %667 = vmatpush.bf16.msra.mxu0 %v654
    %668 = vmatpush.bf16.msra.mxu0 %v653
    %669 = vmatmul.bf16.gmra.mxu0 %v190
    %v670 = vpop.f32.mrf.mxu0
    %v671 = vadd.f32 0.0, %v670
    %v672 = vpop.f32.mrf.mxu0
    %v673 = vadd.f32 0.0, %v672
    %674 = vmatmul.bf16.gmra.mxu0 %v193
    %v675 = vpop.f32.mrf.mxu0
    %v676 = vadd.f32 0.0, %v675
    %v677 = vpop.f32.mrf.mxu0
    %v678 = vadd.f32 0.0, %v677
    %679 = vdwg.mxu0
    %v680 = vld [vmem:[#allocation8 + $0x4] sm:$0x1]
    %v681 = vperm.slane %v680, 0
    %v682 = vmul.f32 %v671, %v681
    %v683 = vmul.f32 %v673, %v681
    %v684 = vmul.f32 %v676, %v681
    %v685 = vmul.f32 %v678, %v681
    %v686 = vld [vmem:[#allocation8 + $0x5] sm:$0x1]
    %v687 = vperm.slane %v686, 0
    %v688 = vadd.f32 %v682, %v687
    %v689 = vadd.f32 %v683, %v687
    %v690 = vadd.f32 %v684, %v687
    %v691 = vadd.f32 %v685, %v687
    %v692 = vadd.f32 %v625, %v688
    %v693 = vadd.f32 %v626, %v689
    %v694 = vadd.f32 %v627, %v690
    %v695 = vadd.f32 %v628, %v691
    %v696 = vmax.f32 %v692, 0.0
    %v697 = vmax.f32 %v693, 0.0
    %v698 = vmax.f32 %v694, 0.0
    %v699 = vmax.f32 %v695, 0.0
    %v700 = vpack.c.bf16 %v696, %v696
    %v701 = vpack.c.bf16 %v697, %v697
    %v702 = vpack.c.bf16 %v698, %v698
    %v703 = vpack.c.bf16 %v699, %v699
    %704 = vst [vmem:[#allocation10] sm:$0xf] %v700
    %705 = vst [vmem:[#allocation10 + $0x4] sm:$0xf] %v701
    %706 = vst [vmem:[#allocation10 + $0x8] sm:$0xf] %v702
    %707 = vst [vmem:[#allocation10 + $0xc] sm:$0xf] %v703
    // Predicated region
    $region42: #{tpu_custom_call.1} parent=1 // pred_check
      _
    $region43: #{tpu_custom_call.1} parent=1 // pred_check_branch
      %709 = sbr.rel (0) target = $region45
    $region44: #{tpu_custom_call.1} parent=1 // pred_region
      %711 = vsyncadd [#allocation4], 0
      %s712 = sshll.u32 [#allocation10], 4
      %s713 = int_to_ptr.vmem [resolvable:$true] %s712
      %s714 = sshll.u32 %s6, 4
      %s715 = int_to_ptr.hbm [resolvable:$true] %s714
      %720 = dma.vmem_to_hbm [thread:$0]  %s713, 256, %s715, [#allocation4], 64, 64, 4
    $region45: #{tpu_custom_call.1} parent=1 // pred_fallthru
      _
    // Predicated region
    $region46: #{tpu_custom_call.1} parent=1 // pred_check
      _
    $region47: #{tpu_custom_call.1} parent=1 // pred_check_branch
      %722 = sbr.rel (0) target = $region49
    $region48: #{tpu_custom_call.1} parent=1 // pred_region
      %724 = dma.done [#allocation4], 256
    $region49: #{tpu_custom_call.1} parent=1 // pred_fallthru
      _
    %725 = vsyncpa [#allocation3], 1
    %726 = vsyncpa [#allocation6], 1
    %727 = vsyncpa [#allocation9], 1
    %728 = vsyncpa [#allocation4], 1

</llo_original>
